<compile_context>
chip_gen: v7x
topology: tpu7x:2x2x1
jax: 0.10.0
libtpu: 0.0.40
codegen_flags: <defaults>
</compile_context>

<pallas_src>
from functools import partial

import numpy as np
import jax
import jax.numpy as jnp
from jax.experimental import pallas as pl
from jax.experimental.pallas import tpu as pltpu


def _round_up(n: int, m: int) -> int:
    return ((n + m - 1) // m) * m


def _rbf_kernel(x_ref, e_ref, c_ref, o_ref, *, n_features, neg):
    # x_ref: (tn, F) f32        rows of features
    # e_ref: (F, F*bins) f32    block-diagonal selector, rows scaled by sqrt(|gamma|)
    # c_ref: (1, F*bins) f32    tiled centers scaled by sqrt(|gamma|)
    # o_ref: (tn, F*bins)       lane-dense output block
    #
    # Unrolled selector contraction (K = F, tiny and static): builds the lane-dense
    # operand t[n, f*bins + b] = sqrt(|gamma|) * x[n, f] with no padded (tn, F, bins)
    # intermediate and no in-kernel relayout.  Exact in f32.
    t = x_ref[:, 0:1] * e_ref[0:1, :]
    for f in range(1, n_features):
        t = t + x_ref[:, f:f + 1] * e_ref[f:f + 1, :]
    t = t - c_ref[...]
    # neg is a static +/-1.0 so this is exp(-gamma * (x - c)**2) for any sign of gamma.
    o_ref[...] = jnp.exp(neg * (t * t)).astype(o_ref.dtype)


def multi_feature_rbf_expansion(x, *, vmin=0.0, vmax=8.0, bins=40,
                                lengthscale=None, tn=None,
                                out_dtype=jnp.float32):
    """Pallas implementation of MultiFeatureRBFExpansion.forward.

    x: (N, F) -> (N, F*bins), same column ordering as the torch module
    (feature-major: [f0 bins..., f1 bins..., ...]).
    """
    x = jnp.asarray(x, jnp.float32)
    N, F = x.shape
    D = F * bins

    # --- module constants (mirror the torch buffers exactly) -----------------
    centers = np.linspace(vmin, vmax, bins).astype(np.float32)
    if lengthscale is None:
        ls = float(np.diff(centers).mean())
        gamma = 1.0 / ls                       # NOTE: 1/lengthscale (not squared), as in torch
    else:
        gamma = 1.0 / float(lengthscale) ** 2

    sqrt_g = float(np.sqrt(abs(gamma)))
    neg = -1.0 if gamma >= 0.0 else 1.0        # exp(neg * t*t) == exp(-gamma * d*d)

    # Block-diagonal selector (F, D): row f carries sqrt(|gamma|) on lanes [f*bins, (f+1)*bins).
    sel = np.zeros((F, D), dtype=np.float32)
    for f in range(F):
        sel[f, f * bins:(f + 1) * bins] = sqrt_g
    centers_tiled = (np.tile(centers, F) * np.float32(sqrt_g)).reshape(1, D).astype(np.float32)

    # --- tiling ---------------------------------------------------------------
    # Big row tiles amortize the ~0.35us/grid-step pipeline overhead; cap at 1024 so
    # VMEM stays ~4 MiB of double-buffered blocks on every generation (incl. v7x's
    # 64 MiB physical VMEM) and the grid keeps multiple steps for megacore sharding.
    if tn is None:
        tn = min(1024, _round_up(N, 8))
    tn = max(8, _round_up(int(tn), 8))

    grid_n = pl.cdiv(N, tn)
    n_pad = grid_n * tn
    if n_pad != N:
        x = jnp.pad(x, ((0, n_pad - N), (0, 0)))   # padded rows are sliced off below

    cost = pl.CostEstimate(
        flops=n_pad * D * (2 * F + 2),
        transcendentals=n_pad * D,
        bytes_accessed=4 * (n_pad * F + F * D + D) + n_pad * D * jnp.dtype(out_dtype).itemsize,
    )

    out = pl.pallas_call(
        partial(_rbf_kernel, n_features=F, neg=neg),
        out_shape=jax.ShapeDtypeStruct((n_pad, D), out_dtype),
        grid_spec=pltpu.PrefetchScalarGridSpec(
            num_scalar_prefetch=0,
            grid=(grid_n,),
            in_specs=[
                pl.BlockSpec((tn, F), lambda i: (i, 0)),   # x row tile
                pl.BlockSpec((F, D), lambda i: (0, 0)),    # selector (replicated)
                pl.BlockSpec((1, D), lambda i: (0, 0)),    # scaled tiled centers (replicated)
            ],
            out_specs=pl.BlockSpec((tn, D), lambda i: (i, 0)),   # lane-dense output slab
        ),
        compiler_params=pltpu.CompilerParams(
            dimension_semantics=("parallel",)),
        cost_estimate=cost,
    )(x, jnp.asarray(sel), jnp.asarray(centers_tiled))

    return out[:N] if n_pad != N else out


def _reference(x, vmin=0.0, vmax=8.0, bins=40, lengthscale=None):
    centers = np.linspace(vmin, vmax, bins).astype(np.float32)
    if lengthscale is None:
        gamma = 1.0 / float(np.diff(centers).mean())
    else:
        gamma = 1.0 / float(lengthscale) ** 2
    c = jnp.asarray(centers)
    d = x[:, :, None] - c[None, None, :]
    return jnp.exp(-gamma * d * d).reshape(x.shape[0], -1)


if __name__ == "__main__":
    key = jax.random.PRNGKey(0)
    N, F, BINS = 16, 4, 40                    # small shapes consistent with the module
    x = jax.random.uniform(key, (N, F), dtype=jnp.float32, minval=0.0, maxval=8.0)

    out = jax.block_until_ready(multi_feature_rbf_expansion(x, vmin=0.0, vmax=8.0, bins=BINS))
    ref = _reference(x, bins=BINS)
    assert out.shape == (N, F * BINS)
    assert jnp.allclose(out, ref, atol=1e-6, rtol=1e-4)

    # Exercise the cdiv-grid + padded-tail path (N not a multiple of the row tile).
    N2 = 50
    x2 = jax.random.uniform(jax.random.PRNGKey(1), (N2, F), dtype=jnp.float32,
                            minval=0.0, maxval=8.0)
    out2 = jax.block_until_ready(multi_feature_rbf_expansion(x2, bins=BINS, tn=32))
    ref2 = _reference(x2, bins=BINS)
    assert out2.shape == (N2, F * BINS)
    assert jnp.allclose(out2, ref2, atol=1e-6, rtol=1e-4)

    print("KERNEL_OK")
</pallas_src>

<mosaic_0001>
module attributes {stable_mosaic.version = 11 : i64} {
  func.func @_rbf_kernel(%arg0: i32, %arg1: memref<16x4xf32, #tpu.memory_space<vmem>>, %arg2: memref<4x160xf32, #tpu.memory_space<vmem>>, %arg3: memref<1x160xf32, #tpu.memory_space<vmem>>, %arg4: memref<16x160xf32, #tpu.memory_space<vmem>>) attributes {dimension_semantics = [#tpu.dimension_semantics<parallel>], iteration_bounds = array<i64: 1>, scalar_prefetch = 0 : i64, scratch_operands = 0 : i64, tpu.core_type = #tpu.core_type<tc>, window_params = [{transform_indices = @transform_0, window_bounds = array<i64: 16, 4>}, {pipeline_mode = #tpu.pipeline_mode<synchronous>, transform_indices = @transform_1, window_bounds = array<i64: 4, 160>}, {pipeline_mode = #tpu.pipeline_mode<synchronous>, transform_indices = @transform_2, window_bounds = array<i64: 1, 160>}, {transform_indices = @transform_3, window_bounds = array<i64: 16, 160>}]} {
    %c0 = arith.constant 0 : index
    %c0_0 = arith.constant 0 : index
    %0 = vector.load %arg1[%c0, %c0_0] : memref<16x4xf32, #tpu.memory_space<vmem>>, vector<16x1xf32>
    %c0_1 = arith.constant 0 : index
    %c0_2 = arith.constant 0 : index
    %1 = vector.load %arg2[%c0_1, %c0_2] : memref<4x160xf32, #tpu.memory_space<vmem>>, vector<1x160xf32>
    %2 = vector.broadcast %0 : vector<16x1xf32> to vector<16x160xf32>
    %3 = vector.broadcast %1 : vector<1x160xf32> to vector<16x160xf32>
    %4 = arith.mulf %2, %3 : vector<16x160xf32>
    %c0_3 = arith.constant 0 : index
    %c1 = arith.constant 1 : index
    %5 = vector.load %arg1[%c0_3, %c1] : memref<16x4xf32, #tpu.memory_space<vmem>>, vector<16x1xf32>
    %c1_4 = arith.constant 1 : index
    %c0_5 = arith.constant 0 : index
    %6 = vector.load %arg2[%c1_4, %c0_5] : memref<4x160xf32, #tpu.memory_space<vmem>>, vector<1x160xf32>
    %7 = vector.broadcast %5 : vector<16x1xf32> to vector<16x160xf32>
    %8 = vector.broadcast %6 : vector<1x160xf32> to vector<16x160xf32>
    %9 = arith.mulf %7, %8 : vector<16x160xf32>
    %10 = arith.addf %4, %9 : vector<16x160xf32>
    %c0_6 = arith.constant 0 : index
    %c2 = arith.constant 2 : index
    %11 = vector.load %arg1[%c0_6, %c2] : memref<16x4xf32, #tpu.memory_space<vmem>>, vector<16x1xf32>
    %c2_7 = arith.constant 2 : index
    %c0_8 = arith.constant 0 : index
    %12 = vector.load %arg2[%c2_7, %c0_8] : memref<4x160xf32, #tpu.memory_space<vmem>>, vector<1x160xf32>
    %13 = vector.broadcast %11 : vector<16x1xf32> to vector<16x160xf32>
    %14 = vector.broadcast %12 : vector<1x160xf32> to vector<16x160xf32>
    %15 = arith.mulf %13, %14 : vector<16x160xf32>
    %16 = arith.addf %10, %15 : vector<16x160xf32>
    %c0_9 = arith.constant 0 : index
    %c3 = arith.constant 3 : index
    %17 = vector.load %arg1[%c0_9, %c3] : memref<16x4xf32, #tpu.memory_space<vmem>>, vector<16x1xf32>
    %c3_10 = arith.constant 3 : index
    %c0_11 = arith.constant 0 : index
    %18 = vector.load %arg2[%c3_10, %c0_11] : memref<4x160xf32, #tpu.memory_space<vmem>>, vector<1x160xf32>
    %19 = vector.broadcast %17 : vector<16x1xf32> to vector<16x160xf32>
    %20 = vector.broadcast %18 : vector<1x160xf32> to vector<16x160xf32>
    %21 = arith.mulf %19, %20 : vector<16x160xf32>
    %22 = arith.addf %16, %21 : vector<16x160xf32>
    %c0_12 = arith.constant 0 : index
    %c0_13 = arith.constant 0 : index
    %23 = vector.load %arg3[%c0_12, %c0_13] : memref<1x160xf32, #tpu.memory_space<vmem>>, vector<1x160xf32>
    %24 = vector.broadcast %23 : vector<1x160xf32> to vector<16x160xf32>
    %25 = arith.subf %22, %24 : vector<16x160xf32>
    %26 = arith.mulf %25, %25 : vector<16x160xf32>
    %cst = arith.constant -1.000000e+00 : f32
    %27 = vector.broadcast %cst : f32 to vector<16x160xf32>
    %28 = arith.mulf %27, %26 : vector<16x160xf32>
    %29 = math.exp %28 : vector<16x160xf32>
    %c0_14 = arith.constant 0 : index
    %c0_15 = arith.constant 0 : index
    %30 = vector.load %arg4[%c0_14, %c0_15] : memref<16x160xf32, #tpu.memory_space<vmem>>, vector<16x160xf32>
    tpu.vector_store %arg4[%c0_14, %c0_15], %29 {strides = array<i32>} : memref<16x160xf32, #tpu.memory_space<vmem>>, vector<16x160xf32>,
    return
  }
  func.func @transform_0(%arg0: i32) -> (i32, i32) {
    %c0_i32 = arith.constant 0 : i32
    %c0_i32_0 = arith.constant 0 : i32
    return %arg0, %c0_i32 : i32, i32
  }
  func.func @transform_1(%arg0: i32) -> (i32, i32) {
    %c0_i32 = arith.constant 0 : i32
    %c0_i32_0 = arith.constant 0 : i32
    %c0_i32_1 = arith.constant 0 : i32
    return %c0_i32, %c0_i32_0 : i32, i32
  }
  func.func @transform_2(%arg0: i32) -> (i32, i32) {
    %c0_i32 = arith.constant 0 : i32
    %c0_i32_0 = arith.constant 0 : i32
    %c0_i32_1 = arith.constant 0 : i32
    return %c0_i32, %c0_i32_0 : i32, i32
  }
  func.func @transform_3(%arg0: i32) -> (i32, i32) {
    %c0_i32 = arith.constant 0 : i32
    %c0_i32_0 = arith.constant 0 : i32
    return %arg0, %c0_i32 : i32, i32
  }
}

</mosaic_0001>

<llo_original>
// kernel: tpu_custom_call.1
$region0: #{tpu_custom_call.1}
  #allocation0 [shape = 'u32[]', space=smem, size = 0x4, offset = 0x4, fixed_abs, tag = 'smem constant byte address 0x4 - core index']
  #allocation1 [shape = 'u32[144,128]{1,0:T(1,128)}', space=vmem, size = 0x12000, scoped, tag = 'internal scratch']
  %s0 = inlined_call_operand.vmem [shape: f32[16,4], index: 0, kind: input, shape index: {}]
  %s1 = inlined_call_operand.vmem [shape: f32[4,160], index: 1, kind: input, shape index: {}]
  %s2 = inlined_call_operand.vmem [shape: f32[1,160], index: 2, kind: input, shape index: {}]
  %s3 = inlined_call_operand.hbm [shape: f32[16,160], index: 3, kind: output, shape index: {}]
  %s4 = sld [smem:[#allocation0]]
  $region22: #{tpu_custom_call.1} parent=0
    _
  %s6 = ssub.s32 1, %s4
  %s7 = scalar_select 0, %s6, %s4
  $region1: #{tpu_custom_call.1} parent=0
    #allocation2 [shape = 'u8[16384]{0}', space=vmem, size = 0x4000, scoped, tag = 'output window, operand 0, single buffered']
    #allocation3 [shape = 's32[1]{0}', space=sflag, size = 0x4, scoped, tag = 'scoped memory for tpu_custom_call.1']
    %8 = vsyncpa [#allocation3], 0
    // Predicated region
    $region2: #{tpu_custom_call.1} parent=1 // pred_check
      _
    $region3: #{tpu_custom_call.1} parent=1 // pred_check_branch
      %10 = sbr.rel (0) target = $region5
    $region4: #{tpu_custom_call.1} parent=1 // pred_region
      _
    $region5: #{tpu_custom_call.1} parent=1 // pred_fallthru
      _
    // Predicated region
    $region6: #{tpu_custom_call.1} parent=1 // pred_check
      _
    $region7: #{tpu_custom_call.1} parent=1 // pred_check_branch
      %12 = sbr.rel (0) target = $region9
    $region8: #{tpu_custom_call.1} parent=1 // pred_region
      _
    $region9: #{tpu_custom_call.1} parent=1 // pred_fallthru
      _
    // Predicated region
    $region10: #{tpu_custom_call.1} parent=1 // pred_check
      _
    $region11: #{tpu_custom_call.1} parent=1 // pred_check_branch
      %14 = sbr.rel (0) target = $region13
    $region12: #{tpu_custom_call.1} parent=1 // pred_region
      _
    $region13: #{tpu_custom_call.1} parent=1 // pred_fallthru
      _
    %v15 = vld [vmem:[%s0] sm:$0xff]
    %v16 = vld [vmem:[%s0 + $0x8] sm:$0xff]
    %v17 = vld [vmem:[%s1] ss:$4 sm:$0x3]
    %19 = vset.pattern.permute.xlu0 0
    %20 = vperm.xlu0 %19, %v15
    %v21 = vpop.permute.xlu0 %20
    %24 = vset.pattern.permute.xlu0 0
    %25 = vperm.xlu0 %24, %v16
    %v26 = vpop.permute.xlu0 %25
    %v29 = vlaneseq
    %v30 = vshrl.u32 %v29, 7
    %v31 = vsub.s32 0, %v30
    %v32 = vrot.slane %v17, %v31
    %v33 = vlaneseq
    %v34 = vshrl.u32 %v33, 7
    %v35 = vsub.s32 1, %v34
    %v36 = vrot.slane %v17, %v35
    %v39 = vmul.f32 %v21, %v32
    %v40 = vmul.f32 %v21, %v36
    %v41 = vmul.f32 %v26, %v32
    %v42 = vmul.f32 %v26, %v36
    %s43 = scalar_lea.vmem %s1, 1
    %v44 = vld [vmem:[%s43] ss:$4 sm:$0x3]
    %45 = vset.pattern.permute.xlu0 1
    %46 = vperm.xlu0 %45, %v15
    %v47 = vpop.permute.xlu0 %46
    %49 = vset.pattern.permute.xlu0 1
    %50 = vperm.xlu0 %49, %v16
    %v51 = vpop.permute.xlu0 %50
    %v54 = vlaneseq
    %v55 = vshrl.u32 %v54, 7
    %v56 = vsub.s32 0, %v55
    %v57 = vrot.slane %v44, %v56
    %v58 = vlaneseq
    %v59 = vshrl.u32 %v58, 7
    %v60 = vsub.s32 1, %v59
    %v61 = vrot.slane %v44, %v60
    %v64 = vmul.f32 %v47, %v57
    %v65 = vmul.f32 %v47, %v61
    %v66 = vmul.f32 %v51, %v57
    %v67 = vmul.f32 %v51, %v61
    %v68 = vadd.f32 %v39, %v64
    %v69 = vadd.f32 %v40, %v65
    %v70 = vadd.f32 %v41, %v66
    %v71 = vadd.f32 %v42, %v67
    %s72 = scalar_lea.vmem %s1, 2
    %v73 = vld [vmem:[%s72] ss:$4 sm:$0x3]
    %74 = vset.pattern.permute.xlu0 2
    %75 = vperm.xlu0 %74, %v15
    %v76 = vpop.permute.xlu0 %75
    %78 = vset.pattern.permute.xlu0 2
    %79 = vperm.xlu0 %78, %v16
    %v80 = vpop.permute.xlu0 %79
    %v83 = vlaneseq
    %v84 = vshrl.u32 %v83, 7
    %v85 = vsub.s32 0, %v84
    %v86 = vrot.slane %v73, %v85
    %v87 = vlaneseq
    %v88 = vshrl.u32 %v87, 7
    %v89 = vsub.s32 1, %v88
    %v90 = vrot.slane %v73, %v89
    %v93 = vmul.f32 %v76, %v86
    %v94 = vmul.f32 %v76, %v90
    %v95 = vmul.f32 %v80, %v86
    %v96 = vmul.f32 %v80, %v90
    %v97 = vadd.f32 %v68, %v93
    %v98 = vadd.f32 %v69, %v94
    %v99 = vadd.f32 %v70, %v95
    %v100 = vadd.f32 %v71, %v96
    %s101 = scalar_lea.vmem %s1, 3
    %v102 = vld [vmem:[%s101] ss:$4 sm:$0x3]
    %103 = vset.pattern.permute.xlu0 3
    %104 = vperm.xlu0 %103, %v15
    %v105 = vpop.permute.xlu0 %104
    %107 = vset.pattern.permute.xlu0 3
    %108 = vperm.xlu0 %107, %v16
    %v109 = vpop.permute.xlu0 %108
    %v112 = vlaneseq
    %v113 = vshrl.u32 %v112, 7
    %v114 = vsub.s32 0, %v113
    %v115 = vrot.slane %v102, %v114
    %v116 = vlaneseq
    %v117 = vshrl.u32 %v116, 7
    %v118 = vsub.s32 1, %v117
    %v119 = vrot.slane %v102, %v118
    %v122 = vmul.f32 %v105, %v115
    %v123 = vmul.f32 %v105, %v119
    %v124 = vmul.f32 %v109, %v115
    %v125 = vmul.f32 %v109, %v119
    %v126 = vadd.f32 %v97, %v122
    %v127 = vadd.f32 %v98, %v123
    %v128 = vadd.f32 %v99, %v124
    %v129 = vadd.f32 %v100, %v125
    %v130 = vld [vmem:[%s2] sm:$0x3]
    %v132 = vlaneseq
    %v133 = vshrl.u32 %v132, 7
    %v134 = vsub.s32 0, %v133
    %v135 = vrot.slane %v130, %v134
    %v136 = vlaneseq
    %v137 = vshrl.u32 %v136, 7
    %v138 = vsub.s32 1, %v137
    %v139 = vrot.slane %v130, %v138
    %v142 = vsub.f32 %v126, %v135
    %v143 = vsub.f32 %v127, %v139
    %v144 = vsub.f32 %v128, %v135
    %v145 = vsub.f32 %v129, %v139
    %v146 = vmul.f32 %v142, %v142
    %v147 = vmul.f32 %v143, %v143
    %v148 = vmul.f32 %v144, %v144
    %v149 = vmul.f32 %v145, %v145
    %v150 = vmul.f32 %v146, -1.0
    %v151 = vmul.f32 %v147, -1.0
    %v152 = vmul.f32 %v148, -1.0
    %v153 = vmul.f32 %v149, -1.0
    %v154 = vmul.f32 %v150, 1.442695
    %v155 = vpow.pop %v154
    %v156 = vmul.f32 %v151, 1.442695
    %v157 = vpow.pop %v156
    %v158 = vmul.f32 %v152, 1.442695
    %v159 = vpow.pop %v158
    %v160 = vmul.f32 %v153, 1.442695
    %v161 = vpow.pop %v160
    %162 = vst [vmem:[#allocation2] sm:$0xff] %v155
    %vm163 = vcmask 261120
    %164 = vst.msk [vmem:[#allocation2 + $0x8] sm:$0xff] %vm163, %v157
    %165 = vst [vmem:[#allocation2 + $0x10] sm:$0xff] %v159
    %166 = vst.msk [vmem:[#allocation2 + $0x18] sm:$0xff] %vm163, %v161
    // Predicated region
    $region14: #{tpu_custom_call.1} parent=1 // pred_check
      _
    $region15: #{tpu_custom_call.1} parent=1 // pred_check_branch
      %168 = sbr.rel (0) target = $region17
    $region16: #{tpu_custom_call.1} parent=1 // pred_region
      %s170 = ssub.s32 512, 512
      %171 = vsyncadd [#allocation3], %s170
      %s172 = sshll.u32 [#allocation2], 4
      %s173 = int_to_ptr.vmem [resolvable:$true] %s172
      %178 = dma.vmem_to_hbm [thread:$0]  %s173, 512, %s3, [#allocation3], 256, 256, 16
    $region17: #{tpu_custom_call.1} parent=1 // pred_fallthru
      _
    // Predicated region
    $region18: #{tpu_custom_call.1} parent=1 // pred_check
      _
    $region19: #{tpu_custom_call.1} parent=1 // pred_check_branch
      %180 = sbr.rel (0) target = $region21
    $region20: #{tpu_custom_call.1} parent=1 // pred_region
      %181 = dma.done [#allocation3], 512
    $region21: #{tpu_custom_call.1} parent=1 // pred_fallthru
      _
    %182 = vsyncpa [#allocation3], 1

</llo_original>
